<compile_context>
chip_gen: v5e
topology: v5e:2x2
jax: 0.10.0
libtpu: 0.0.40
codegen_flags: <defaults>
</compile_context>

<pallas_src>
import functools

import numpy as np
import jax
import jax.numpy as jnp
from jax import lax
from jax.experimental import pallas as pl
from jax.experimental.pallas import tpu as pltpu


def _round_up(x, m):
    return (x + m - 1) // m * m


# ------------------------------------------------------------- projection ---
def qkv_proj_kernel(h_ref, w_ref, b_ref, q_ref, k_ref, v_ref, *,
                    proj_pad, inv_sqrt_d):
    h = h_ref[...]
    qkv = jnp.dot(h, w_ref[...], preferred_element_type=jnp.float32) + b_ref[...]
    # fold the 1/sqrt(d) score scale into Q here (cheap O(N*d) multiply)
    q_ref[...] = qkv[:, :proj_pad] * inv_sqrt_d
    k_ref[...] = qkv[:, proj_pad:2 * proj_pad]
    v_ref[...] = qkv[:, 2 * proj_pad:]


# -------------------------------------------------------------- attention ---
def attn_kernel(q_ref, k_ref, v_ref, adj_ref, out_ref, m_sc, l_sc, acc_sc):
    ki = pl.program_id(1)

    @pl.when(ki == 0)
    def _():
        m_sc[...] = jnp.full_like(m_sc, -jnp.inf)
        l_sc[...] = jnp.zeros_like(l_sc)
        acc_sc[...] = jnp.zeros_like(acc_sc)

    # scores without an explicit transpose: contract the last axis of q and k
    s = lax.dot_general(q_ref[...], k_ref[...],
                        dimension_numbers=(((1,), (1,)), ((), ())),
                        preferred_element_type=jnp.float32)       # (tq, tk)
    edge = adj_ref[...] > 0

    # dense-reference semantics: non-edges are literal 0 and take part in the
    # row max (shift-invariant for the final normalized output).
    e = jnp.where(edge, s, 0.0)
    m_prev = m_sc[...]
    m_new = jnp.maximum(m_prev, jnp.max(e, axis=1, keepdims=True))
    alpha = jnp.exp(m_prev - m_new)                 # 0 at the first kv block
    p = jnp.where(edge, jnp.exp(e - m_new), 0.0)

    l_sc[...] = alpha * l_sc[...] + jnp.sum(p, axis=1, keepdims=True)
    acc_sc[...] = alpha * acc_sc[...] + jnp.dot(
        p, v_ref[...], preferred_element_type=jnp.float32)
    m_sc[...] = m_new

    @pl.when(ki == pl.num_programs(1) - 1)
    def _():
        z = l_sc[...]
        # exact reciprocal (parity with the reference divide); rows with no
        # edges (padding / isolated nodes) produce 0 instead of NaN and are
        # sliced off in the wrapper.
        inv = jnp.where(z > 0.0, pl.reciprocal(z, approx=False), 0.0)
        out_ref[...] = (acc_sc[...] * inv).astype(out_ref.dtype)


# ---------------------------------------------------------------- wrapper ---
def multi_head_attention_dense(h, wq, bq, wk, bk, wv, bv, adj, *,
                               out_dim, num_heads=1, tile=256):
    assert num_heads == 1, "dense squeeze path implies num_heads == 1"
    assert tile % 128 == 0
    n, in_dim = h.shape
    proj = out_dim * num_heads
    proj_pad = _round_up(proj, 128)          # lane-dense Q/K/V/output last dim

    if n <= tile:
        n_pad = _round_up(n, 16)
        tq = tk = n_pad                      # single block == full padded dims
    else:
        n_pad = _round_up(n, tile)
        tq = tk = tile

    # fused, zero-padded QKV weights / biases: (in_dim, 3*proj_pad)
    def pad_cols(x):
        return jnp.pad(x, ((0, 0), (0, proj_pad - x.shape[1])))

    w_qkv = jnp.concatenate([pad_cols(wq), pad_cols(wk), pad_cols(wv)], axis=1)
    b_qkv = jnp.concatenate([pad_cols(bq), pad_cols(bk), pad_cols(bv)], axis=1)

    h_p = jnp.pad(h, ((0, n_pad - n), (0, 0)))
    # adjacency is a 0/1 mask -> bf16 halves the dominant O(N^2) HBM stream
    adj_p = jnp.pad(adj, ((0, n_pad - n), (0, n_pad - n))).astype(jnp.bfloat16)

    # ---- kernel 1: fused QKV projection, tiled over node rows --------------
    proj_kernel = functools.partial(
        qkv_proj_kernel, proj_pad=proj_pad,
        inv_sqrt_d=np.float32(1.0 / np.sqrt(out_dim)))
    qkv_shape = jax.ShapeDtypeStruct((n_pad, proj_pad), jnp.float32)
    q, k, v = pl.pallas_call(
        proj_kernel,
        out_shape=(qkv_shape, qkv_shape, qkv_shape),
        grid_spec=pltpu.PrefetchScalarGridSpec(
            num_scalar_prefetch=0,
            grid=(n_pad // tq,),
            in_specs=[
                pl.BlockSpec((tq, in_dim), lambda i: (i, 0)),
                pl.BlockSpec((in_dim, 3 * proj_pad), lambda i: (0, 0)),
                pl.BlockSpec((1, 3 * proj_pad), lambda i: (0, 0)),
            ],
            out_specs=(
                pl.BlockSpec((tq, proj_pad), lambda i: (i, 0)),
                pl.BlockSpec((tq, proj_pad), lambda i: (i, 0)),
                pl.BlockSpec((tq, proj_pad), lambda i: (i, 0)),
            ),
        ),
        compiler_params=pltpu.CompilerParams(
            dimension_semantics=("parallel",)),
    )(h_p, w_qkv, b_qkv)

    # ---- kernel 2: tiled masked attention, online softmax over kv blocks ---
    out_p = pl.pallas_call(
        attn_kernel,
        out_shape=jax.ShapeDtypeStruct((n_pad, proj_pad), jnp.float32),
        grid_spec=pltpu.PrefetchScalarGridSpec(
            num_scalar_prefetch=0,
            grid=(n_pad // tq, n_pad // tk),
            in_specs=[
                pl.BlockSpec((tq, proj_pad), lambda qi, ki: (qi, 0)),
                pl.BlockSpec((tk, proj_pad), lambda qi, ki: (ki, 0)),
                pl.BlockSpec((tk, proj_pad), lambda qi, ki: (ki, 0)),
                pl.BlockSpec((tq, tk), lambda qi, ki: (qi, ki)),
            ],
            out_specs=pl.BlockSpec((tq, proj_pad), lambda qi, ki: (qi, 0)),
            scratch_shapes=[
                pltpu.VMEM((tq, 1), jnp.float32),          # running row max
                pltpu.VMEM((tq, 1), jnp.float32),          # running row sum z
                pltpu.VMEM((tq, proj_pad), jnp.float32),   # running E @ V
            ],
        ),
        compiler_params=pltpu.CompilerParams(
            dimension_semantics=("parallel", "arbitrary")),
    )(q, k, v, adj_p)

    return out_p[:n, :proj]


# -------------------------------------------------------------- reference ---
def reference_jnp(h, wq, bq, wk, bk, wv, bv, adj, out_dim):
    q = h @ wq + bq
    k = h @ wk + bk
    v = h @ wv + bv
    s = q @ k.T
    edge = adj > 0
    e = jnp.where(edge, s / np.sqrt(out_dim), 0.0)
    e_max = jnp.max(e, axis=1, keepdims=True)
    e = jnp.where(edge, jnp.exp(e - e_max), 0.0)
    o = e @ v
    z = jnp.sum(e, axis=1, keepdims=True)
    return o / z


def _make_case(key, n, in_dim, out_dim, num_heads=1, use_bias=True):
    k_h, k_wq, k_bq, k_wk, k_bk, k_wv, k_bv, k_adj = jax.random.split(key, 8)
    bound = 1.0 / np.sqrt(in_dim)
    proj = out_dim * num_heads
    wq = jax.random.uniform(k_wq, (in_dim, proj), jnp.float32, -bound, bound)
    wk = jax.random.uniform(k_wk, (in_dim, proj), jnp.float32, -bound, bound)
    wv = jax.random.uniform(k_wv, (in_dim, proj), jnp.float32, -bound, bound)
    if use_bias:
        bq = jax.random.uniform(k_bq, (1, proj), jnp.float32, -bound, bound)
        bk = jax.random.uniform(k_bk, (1, proj), jnp.float32, -bound, bound)
        bv = jax.random.uniform(k_bv, (1, proj), jnp.float32, -bound, bound)
    else:
        bq = bk = bv = jnp.zeros((1, proj), jnp.float32)
    h = jax.random.normal(k_h, (n, in_dim), jnp.float32)
    adj = (jax.random.uniform(k_adj, (n, n)) < 0.3).astype(jnp.float32)
    adj = jnp.maximum(adj, jnp.eye(n, dtype=jnp.float32))  # self-loops: z > 0
    return h, wq, bq, wk, bk, wv, bv, adj


if __name__ == "__main__":
    key = jax.random.PRNGKey(0)
    k1, k2 = jax.random.split(key)

    # case 1: tiny graph -> single (q, kv) block, grid (1, 1)
    args1 = _make_case(k1, n=48, in_dim=32, out_dim=16)
    out1 = jax.block_until_ready(
        multi_head_attention_dense(*args1, out_dim=16, tile=256))
    ref1 = reference_jnp(*args1, out_dim=16)
    if not np.allclose(np.asarray(out1), np.asarray(ref1), rtol=1e-4, atol=1e-5):
        raise AssertionError("case 1: Pallas kernel mismatch vs JAX reference")

    # case 2: exercises the tiled online-softmax path (padded N=256, grid 2x2)
    args2 = _make_case(k2, n=200, in_dim=40, out_dim=24)
    out2 = jax.block_until_ready(
        multi_head_attention_dense(*args2, out_dim=24, tile=128))
    ref2 = reference_jnp(*args2, out_dim=24)
    if not np.allclose(np.asarray(out2), np.asarray(ref2), rtol=1e-4, atol=1e-5):
        raise AssertionError("case 2: Pallas kernel mismatch vs JAX reference")

    # TODO(synk): the torch forward also returns a CUDA-event kernel_time;
    # there is no Pallas-side timing equivalent, so only the output is returned.
    print("KERNEL_OK")
</pallas_src>

<mosaic_0001>
module attributes {stable_mosaic.version = 11 : i64} {
  func.func @qkv_proj_kernel(%arg0: i32, %arg1: memref<48x32xf32, #tpu.memory_space<vmem>>, %arg2: memref<32x384xf32, #tpu.memory_space<vmem>>, %arg3: memref<1x384xf32, #tpu.memory_space<vmem>>, %arg4: memref<48x128xf32, #tpu.memory_space<vmem>>, %arg5: memref<48x128xf32, #tpu.memory_space<vmem>>, %arg6: memref<48x128xf32, #tpu.memory_space<vmem>>) attributes {dimension_semantics = [#tpu.dimension_semantics<parallel>], iteration_bounds = array<i64: 1>, scalar_prefetch = 0 : i64, scratch_operands = 0 : i64, tpu.core_type = #tpu.core_type<tc>, window_params = [{transform_indices = @transform_0, window_bounds = array<i64: 48, 32>}, {pipeline_mode = #tpu.pipeline_mode<synchronous>, transform_indices = @transform_1, window_bounds = array<i64: 32, 384>}, {pipeline_mode = #tpu.pipeline_mode<synchronous>, transform_indices = @transform_2, window_bounds = array<i64: 1, 384>}, {transform_indices = @transform_3, window_bounds = array<i64: 48, 128>}, {transform_indices = @transform_4, window_bounds = array<i64: 48, 128>}, {transform_indices = @transform_5, window_bounds = array<i64: 48, 128>}]} {
    %c0 = arith.constant 0 : index
    %c0_0 = arith.constant 0 : index
    %0 = vector.load %arg1[%c0, %c0_0] : memref<48x32xf32, #tpu.memory_space<vmem>>, vector<48x32xf32>
    %c0_1 = arith.constant 0 : index
    %c0_2 = arith.constant 0 : index
    %1 = vector.load %arg2[%c0_1, %c0_2] : memref<32x384xf32, #tpu.memory_space<vmem>>, vector<32x384xf32>
    %cst = arith.constant dense<0.000000e+00> : vector<48x384xf32>
    %2 = tpu.matmul %0, %1, %cst {dimension_numbers = #tpu.dot_dimension_numbers<[1], [0], [0], [1], [0, 0, 1, 1], [], []>} : vector<48x32xf32>, vector<32x384xf32>, vector<48x384xf32> -> vector<48x384xf32>
    %c0_3 = arith.constant 0 : index
    %c0_4 = arith.constant 0 : index
    %3 = vector.load %arg3[%c0_3, %c0_4] : memref<1x384xf32, #tpu.memory_space<vmem>>, vector<1x384xf32>
    %4 = vector.broadcast %3 : vector<1x384xf32> to vector<48x384xf32>
    %5 = arith.addf %2, %4 : vector<48x384xf32>
    %6 = vector.extract_strided_slice %5 {offsets = [0, 0], sizes = [48, 128], strides = [1, 1]} : vector<48x384xf32> to vector<48x128xf32>
    %cst_5 = arith.constant 2.500000e-01 : f32
    %7 = vector.broadcast %cst_5 : f32 to vector<48x128xf32>
    %8 = arith.mulf %6, %7 : vector<48x128xf32>
    %c0_6 = arith.constant 0 : index
    %c0_7 = arith.constant 0 : index
    %9 = vector.load %arg4[%c0_6, %c0_7] : memref<48x128xf32, #tpu.memory_space<vmem>>, vector<48x128xf32>
    tpu.vector_store %arg4[%c0_6, %c0_7], %8 {strides = array<i32>} : memref<48x128xf32, #tpu.memory_space<vmem>>, vector<48x128xf32>,
    %10 = vector.extract_strided_slice %5 {offsets = [0, 128], sizes = [48, 128], strides = [1, 1]} : vector<48x384xf32> to vector<48x128xf32>
    %c0_8 = arith.constant 0 : index
    %c0_9 = arith.constant 0 : index
    %11 = vector.load %arg5[%c0_8, %c0_9] : memref<48x128xf32, #tpu.memory_space<vmem>>, vector<48x128xf32>
    tpu.vector_store %arg5[%c0_8, %c0_9], %10 {strides = array<i32>} : memref<48x128xf32, #tpu.memory_space<vmem>>, vector<48x128xf32>,
    %12 = vector.extract_strided_slice %5 {offsets = [0, 256], sizes = [48, 128], strides = [1, 1]} : vector<48x384xf32> to vector<48x128xf32>
    %c0_10 = arith.constant 0 : index
    %c0_11 = arith.constant 0 : index
    %13 = vector.load %arg6[%c0_10, %c0_11] : memref<48x128xf32, #tpu.memory_space<vmem>>, vector<48x128xf32>
    tpu.vector_store %arg6[%c0_10, %c0_11], %12 {strides = array<i32>} : memref<48x128xf32, #tpu.memory_space<vmem>>, vector<48x128xf32>,
    return
  }
  func.func @transform_0(%arg0: i32) -> (i32, i32) {
    %c0_i32 = arith.constant 0 : i32
    %c0_i32_0 = arith.constant 0 : i32
    return %arg0, %c0_i32 : i32, i32
  }
  func.func @transform_1(%arg0: i32) -> (i32, i32) {
    %c0_i32 = arith.constant 0 : i32
    %c0_i32_0 = arith.constant 0 : i32
    %c0_i32_1 = arith.constant 0 : i32
    return %c0_i32, %c0_i32_0 : i32, i32
  }
  func.func @transform_2(%arg0: i32) -> (i32, i32) {
    %c0_i32 = arith.constant 0 : i32
    %c0_i32_0 = arith.constant 0 : i32
    %c0_i32_1 = arith.constant 0 : i32
    return %c0_i32, %c0_i32_0 : i32, i32
  }
  func.func @transform_3(%arg0: i32) -> (i32, i32) {
    %c0_i32 = arith.constant 0 : i32
    %c0_i32_0 = arith.constant 0 : i32
    return %arg0, %c0_i32 : i32, i32
  }
  func.func @transform_4(%arg0: i32) -> (i32, i32) {
    %c0_i32 = arith.constant 0 : i32
    %c0_i32_0 = arith.constant 0 : i32
    return %arg0, %c0_i32 : i32, i32
  }
  func.func @transform_5(%arg0: i32) -> (i32, i32) {
    %c0_i32 = arith.constant 0 : i32
    %c0_i32_0 = arith.constant 0 : i32
    return %arg0, %c0_i32 : i32, i32
  }
}

</mosaic_0001>

<llo_original>
// kernel: tpu_custom_call.1
$region0: #{tpu_custom_call.1}
  #allocation0 [shape = 'u32[]', space=smem, size = 0x4, offset = 0x4, fixed_abs, tag = 'smem constant byte address 0x4 - core index']
  #allocation1 [shape = 'u32[72,128]{1,0:T(1,128)}', space=vmem, size = 0x9000, scoped, tag = 'internal scratch']
  %s0 = inlined_call_operand.vmem [shape: f32[48,32], index: 0, kind: input, shape index: {}]
  %s1 = inlined_call_operand.hbm [shape: f32[32,384], index: 1, kind: input, shape index: {}]
  %s2 = inlined_call_operand.vmem [shape: f32[1,384], index: 2, kind: input, shape index: {}]
  %s3 = inlined_call_operand.hbm [shape: f32[48,128], index: 3, kind: output, shape index: {0}]
  %s4 = inlined_call_operand.hbm [shape: f32[48,128], index: 4, kind: output, shape index: {1}]
  %s5 = inlined_call_operand.hbm [shape: f32[48,128], index: 5, kind: output, shape index: {2}]
  %6 = xla_tuple %s3, %s4, %s5
  %s7 = sld [smem:[#allocation0]]
  $region42: #{tpu_custom_call.1} parent=0
    _
  %s9 = ssub.s32 1, %s7
  %s10 = scalar_select 0, %s9, %s7
  $region1: #{tpu_custom_call.1} parent=0
    #allocation2 [shape = 'u8[49152]{0}', space=vmem, size = 0xc000, scoped, tag = 'input window, operand 1, single buffered']
    #allocation3 [shape = 's32[1]{0}', space=sflag, size = 0x4, scoped, tag = 'scoped memory for tpu_custom_call.1']
    #allocation4 [shape = 's32[1]{0}', space=sflag, size = 0x4, scoped, tag = 'scoped memory for tpu_custom_call.1']
    #allocation5 [shape = 'u8[24576]{0}', space=vmem, size = 0x6000, scoped, tag = 'output window, operand 0, single buffered']
    #allocation6 [shape = 'u8[24576]{0}', space=vmem, size = 0x6000, scoped, tag = 'output window, operand 1, single buffered']
    #allocation7 [shape = 's32[1]{0}', space=sflag, size = 0x4, scoped, tag = 'scoped memory for tpu_custom_call.1']
    #allocation8 [shape = 'u8[24576]{0}', space=vmem, size = 0x6000, scoped, tag = 'output window, operand 2, single buffered']
    %11 = vsyncpa [#allocation3], 0
    %12 = vsyncpa [#allocation4], 0
    %13 = vsyncpa [#allocation7], 0
    // Predicated region
    $region2: #{tpu_custom_call.1} parent=1 // pred_check
      _
    $region3: #{tpu_custom_call.1} parent=1 // pred_check_branch
      %15 = sbr.rel (0) target = $region5
    $region4: #{tpu_custom_call.1} parent=1 // pred_region
      _
    $region5: #{tpu_custom_call.1} parent=1 // pred_fallthru
      _
    // Predicated region
    $region6: #{tpu_custom_call.1} parent=1 // pred_check
      _
    $region7: #{tpu_custom_call.1} parent=1 // pred_check_branch
      %17 = sbr.rel (0) target = $region9
    $region8: #{tpu_custom_call.1} parent=1 // pred_region
      %19 = vsyncadd [#allocation3], 0
      %s20 = sshll.u32 %s1, 4
      %s21 = int_to_ptr.hbm [resolvable:$true] %s20
      %s22 = sshll.u32 [#allocation2], 4
      %s23 = int_to_ptr.vmem [resolvable:$true] %s22
      %28 = dma.hbm_to_vmem [thread:$0]  %s21, 1536, %s23, [#allocation3], 384, 384, 24
    $region9: #{tpu_custom_call.1} parent=1 // pred_fallthru
      _
    // Predicated region
    $region10: #{tpu_custom_call.1} parent=1 // pred_check
      _
    $region11: #{tpu_custom_call.1} parent=1 // pred_check_branch
      %30 = sbr.rel (0) target = $region13
    $region12: #{tpu_custom_call.1} parent=1 // pred_region
      _
    $region13: #{tpu_custom_call.1} parent=1 // pred_fallthru
      _
    // Predicated region
    $region14: #{tpu_custom_call.1} parent=1 // pred_check
      _
    $region15: #{tpu_custom_call.1} parent=1 // pred_check_branch
      %32 = sbr.rel (0) target = $region17
    $region16: #{tpu_custom_call.1} parent=1 // pred_region
      %34 = dma.done [#allocation3], 1536
    $region17: #{tpu_custom_call.1} parent=1 // pred_fallthru
      _
    %v35 = vld [vmem:[%s0] sm:$0xff]
    %v36 = vld [vmem:[%s0 + $0x8] sm:$0xff]
    %v37 = vld [vmem:[%s0 + $0x10] sm:$0xff]
    %v38 = vld [vmem:[%s0 + $0x18] sm:$0xff]
    %v39 = vld [vmem:[%s0 + $0x20] sm:$0xff]
    %v40 = vld [vmem:[%s0 + $0x28] sm:$0xff]
    %v41 = vld [vmem:[#allocation2] sm:$0xff]
    %v42 = vld [vmem:[#allocation2 + $0x8] sm:$0xff]
    %v43 = vld [vmem:[#allocation2 + $0x10] sm:$0xff]
    %v44 = vld [vmem:[#allocation2 + $0x18] sm:$0xff]
    %v45 = vld [vmem:[#allocation2 + $0x20] sm:$0xff]
    %v46 = vld [vmem:[#allocation2 + $0x28] sm:$0xff]
    %v47 = vld [vmem:[#allocation2 + $0x30] sm:$0xff]
    %v48 = vld [vmem:[#allocation2 + $0x38] sm:$0xff]
    %v49 = vld [vmem:[#allocation2 + $0x40] sm:$0xff]
    %v50 = vld [vmem:[#allocation2 + $0x48] sm:$0xff]
    %v51 = vld [vmem:[#allocation2 + $0x50] sm:$0xff]
    %v52 = vld [vmem:[#allocation2 + $0x58] sm:$0xff]
    %v53 = vld [vmem:[%s2] sm:$0x7]
    %v55 = vperm.slane %v53, 0
    %v56 = vperm.slane %v53, 1
    %v57 = vperm.slane %v53, 2
    %vm61 = vcmask 261120
    %v63 = vsel %vm61, %v35, 0
    %v66 = vsel %vm61, %v36, 0
    %v69 = vsel %vm61, %v37, 0
    %v72 = vsel %vm61, %v38, 0
    %v75 = vsel %vm61, %v39, 0
    %v78 = vsel %vm61, %v40, 0
    %80 = vmatpush.msra.mxu0 0.0
    %81 = vmatpush.msra.mxu0 0.0
    %82 = vmatpush.msra.mxu0 0.0
    %83 = vmatpush.msra.mxu0 0.0
    %84 = vmatpush.msra.mxu0 0.0
    %85 = vmatpush.msra.mxu0 0.0
    %86 = vmatpush.msra.mxu0 0.0
    %87 = vmatpush.msra.mxu0 0.0
    %88 = vmatpush.msra.mxu0 0.0
    %89 = vmatpush.msra.mxu0 0.0
    %90 = vmatpush.msra.mxu0 0.0
    %91 = vmatpush.msra.mxu0 0.0
    %92 = vmatpush.msra.mxu0 %v50
    %93 = vmatpush.msra.mxu0 %v47
    %94 = vmatpush.msra.mxu0 %v44
    %95 = vmatpush.msra.mxu0 %v41
    %96 = vmatmul.f32.gmra.mxu0 %v63
    %v97 = vpop.f32.mrf.mxu0
    %v98 = vadd.f32 %v55, %v97
    %99 = vmatmul.f32.gmra.mxu0 %v66
    %v100 = vpop.f32.mrf.mxu0
    %v101 = vadd.f32 %v55, %v100
    %102 = vmatmul.f32.gmra.mxu0 %v69
    %v103 = vpop.f32.mrf.mxu0
    %v104 = vadd.f32 %v55, %v103
    %105 = vmatmul.f32.gmra.mxu0 %v72
    %v106 = vpop.f32.mrf.mxu0
    %v107 = vadd.f32 %v55, %v106
    %108 = vmatmul.f32.gmra.mxu0 %v75
    %v109 = vpop.f32.mrf.mxu0
    %v110 = vadd.f32 %v55, %v109
    %111 = vmatmul.f32.gmra.mxu0 %v78
    %v112 = vpop.f32.mrf.mxu0
    %v113 = vadd.f32 %v55, %v112
    %114 = vdwg.mxu0
    %115 = vmatpush.msra.mxu0 0.0
    %116 = vmatpush.msra.mxu0 0.0
    %117 = vmatpush.msra.mxu0 0.0
    %118 = vmatpush.msra.mxu0 0.0
    %119 = vmatpush.msra.mxu0 0.0
    %120 = vmatpush.msra.mxu0 0.0
    %121 = vmatpush.msra.mxu0 0.0
    %122 = vmatpush.msra.mxu0 0.0
    %123 = vmatpush.msra.mxu0 0.0
    %124 = vmatpush.msra.mxu0 0.0
    %125 = vmatpush.msra.mxu0 0.0
    %126 = vmatpush.msra.mxu0 0.0
    %127 = vmatpush.msra.mxu0 %v51
    %128 = vmatpush.msra.mxu0 %v48
    %129 = vmatpush.msra.mxu0 %v45
    %130 = vmatpush.msra.mxu0 %v42
    %131 = vmatmul.f32.gmra.mxu0 %v63
    %v132 = vpop.f32.mrf.mxu0
    %v133 = vadd.f32 %v56, %v132
    %134 = vmatmul.f32.gmra.mxu0 %v66
    %v135 = vpop.f32.mrf.mxu0
    %v136 = vadd.f32 %v56, %v135
    %137 = vmatmul.f32.gmra.mxu0 %v69
    %v138 = vpop.f32.mrf.mxu0
    %v139 = vadd.f32 %v56, %v138
    %140 = vmatmul.f32.gmra.mxu0 %v72
    %v141 = vpop.f32.mrf.mxu0
    %v142 = vadd.f32 %v56, %v141
    %143 = vmatmul.f32.gmra.mxu0 %v75
    %v144 = vpop.f32.mrf.mxu0
    %v145 = vadd.f32 %v56, %v144
    %146 = vmatmul.f32.gmra.mxu0 %v78
    %v147 = vpop.f32.mrf.mxu0
    %v148 = vadd.f32 %v56, %v147
    %149 = vdwg.mxu0
    %150 = vmatpush.msra.mxu0 0.0
    %151 = vmatpush.msra.mxu0 0.0
    %152 = vmatpush.msra.mxu0 0.0
    %153 = vmatpush.msra.mxu0 0.0
    %154 = vmatpush.msra.mxu0 0.0
    %155 = vmatpush.msra.mxu0 0.0
    %156 = vmatpush.msra.mxu0 0.0
    %157 = vmatpush.msra.mxu0 0.0
    %158 = vmatpush.msra.mxu0 0.0
    %159 = vmatpush.msra.mxu0 0.0
    %160 = vmatpush.msra.mxu0 0.0
    %161 = vmatpush.msra.mxu0 0.0
    %162 = vmatpush.msra.mxu0 %v52
    %163 = vmatpush.msra.mxu0 %v49
    %164 = vmatpush.msra.mxu0 %v46
    %165 = vmatpush.msra.mxu0 %v43
    %166 = vmatmul.f32.gmra.mxu0 %v63
    %v167 = vpop.f32.mrf.mxu0
    %v168 = vadd.f32 %v57, %v167
    %169 = vmatmul.f32.gmra.mxu0 %v66
    %v170 = vpop.f32.mrf.mxu0
    %v171 = vadd.f32 %v57, %v170
    %172 = vmatmul.f32.gmra.mxu0 %v69
    %v173 = vpop.f32.mrf.mxu0
    %v174 = vadd.f32 %v57, %v173
    %175 = vmatmul.f32.gmra.mxu0 %v72
    %v176 = vpop.f32.mrf.mxu0
    %v177 = vadd.f32 %v57, %v176
    %178 = vmatmul.f32.gmra.mxu0 %v75
    %v179 = vpop.f32.mrf.mxu0
    %v180 = vadd.f32 %v57, %v179
    %181 = vmatmul.f32.gmra.mxu0 %v78
    %v182 = vpop.f32.mrf.mxu0
    %v183 = vadd.f32 %v57, %v182
    %184 = vdwg.mxu0
    %v185 = vmul.f32 %v98, 0.25
    %v186 = vmul.f32 %v101, 0.25
    %v187 = vmul.f32 %v104, 0.25
    %v188 = vmul.f32 %v107, 0.25
    %v189 = vmul.f32 %v110, 0.25
    %v190 = vmul.f32 %v113, 0.25
    %191 = vst [vmem:[#allocation5] sm:$0xff] %v185
    %192 = vst [vmem:[#allocation5 + $0x8] sm:$0xff] %v186
    %193 = vst [vmem:[#allocation5 + $0x10] sm:$0xff] %v187
    %194 = vst [vmem:[#allocation5 + $0x18] sm:$0xff] %v188
    %195 = vst [vmem:[#allocation5 + $0x20] sm:$0xff] %v189
    %196 = vst [vmem:[#allocation5 + $0x28] sm:$0xff] %v190
    %197 = vst [vmem:[#allocation6] sm:$0xff] %v133
    %198 = vst [vmem:[#allocation6 + $0x8] sm:$0xff] %v136
    %199 = vst [vmem:[#allocation6 + $0x10] sm:$0xff] %v139
    %200 = vst [vmem:[#allocation6 + $0x18] sm:$0xff] %v142
    %201 = vst [vmem:[#allocation6 + $0x20] sm:$0xff] %v145
    %202 = vst [vmem:[#allocation6 + $0x28] sm:$0xff] %v148
    %203 = vst [vmem:[#allocation8] sm:$0xff] %v168
    %204 = vst [vmem:[#allocation8 + $0x8] sm:$0xff] %v171
    %205 = vst [vmem:[#allocation8 + $0x10] sm:$0xff] %v174
    %206 = vst [vmem:[#allocation8 + $0x18] sm:$0xff] %v177
    %207 = vst [vmem:[#allocation8 + $0x20] sm:$0xff] %v180
    %208 = vst [vmem:[#allocation8 + $0x28] sm:$0xff] %v183
    // Predicated region
    $region18: #{tpu_custom_call.1} parent=1 // pred_check
      _
    $region19: #{tpu_custom_call.1} parent=1 // pred_check_branch
      %210 = sbr.rel (0) target = $region21
    $region20: #{tpu_custom_call.1} parent=1 // pred_region
      %212 = vsyncadd [#allocation4], 0
      %s213 = sshll.u32 [#allocation5], 4
      %s214 = int_to_ptr.vmem [resolvable:$true] %s213
      %s215 = sshll.u32 %s3, 4
      %s216 = int_to_ptr.hbm [resolvable:$true] %s215
      %221 = dma.vmem_to_hbm [thread:$0]  %s214, 768, %s216, [#allocation4], 128, 128, 8
    $region21: #{tpu_custom_call.1} parent=1 // pred_fallthru
      _
    // Predicated region
    $region22: #{tpu_custom_call.1} parent=1 // pred_check
      _
    $region23: #{tpu_custom_call.1} parent=1 // pred_check_branch
      %223 = sbr.rel (0) target = $region25
    $region24: #{tpu_custom_call.1} parent=1 // pred_region
      %225 = vsyncadd [#allocation7], 0
      %s226 = sshll.u32 [#allocation6], 4
      %s227 = int_to_ptr.vmem [resolvable:$true] %s226
      %s228 = sshll.u32 %s4, 4
      %s229 = int_to_ptr.hbm [resolvable:$true] %s228
      %234 = dma.vmem_to_hbm [thread:$0]  %s227, 768, %s229, [#allocation7], 128, 128, 8
    $region25: #{tpu_custom_call.1} parent=1 // pred_fallthru
      _
    // Predicated region
    $region26: #{tpu_custom_call.1} parent=1 // pred_check
      _
    $region27: #{tpu_custom_call.1} parent=1 // pred_check_branch
      %236 = sbr.rel (0) target = $region29
    $region28: #{tpu_custom_call.1} parent=1 // pred_region
      %238 = vsyncadd [#allocation7], 0
      %s239 = sshll.u32 [#allocation8], 4
      %s240 = int_to_ptr.vmem [resolvable:$true] %s239
      %s241 = sshll.u32 %s5, 4
      %s242 = int_to_ptr.hbm [resolvable:$true] %s241
      %247 = dma.vmem_to_hbm [thread:$0]  %s240, 768, %s242, [#allocation7], 128, 128, 8
    $region29: #{tpu_custom_call.1} parent=1 // pred_fallthru
      _
    // Predicated region
    $region30: #{tpu_custom_call.1} parent=1 // pred_check
      _
    $region31: #{tpu_custom_call.1} parent=1 // pred_check_branch
      %249 = sbr.rel (0) target = $region33
    $region32: #{tpu_custom_call.1} parent=1 // pred_region
      %251 = dma.done [#allocation4], 768
    $region33: #{tpu_custom_call.1} parent=1 // pred_fallthru
      _
    // Predicated region
    $region34: #{tpu_custom_call.1} parent=1 // pred_check
      _
    $region35: #{tpu_custom_call.1} parent=1 // pred_check_branch
      %253 = sbr.rel (0) target = $region37
    $region36: #{tpu_custom_call.1} parent=1 // pred_region
      %255 = dma.done [#allocation7], 768
    $region37: #{tpu_custom_call.1} parent=1 // pred_fallthru
      _
    // Predicated region
    $region38: #{tpu_custom_call.1} parent=1 // pred_check
      _
    $region39: #{tpu_custom_call.1} parent=1 // pred_check_branch
      %257 = sbr.rel (0) target = $region41
    $region40: #{tpu_custom_call.1} parent=1 // pred_region
      %259 = dma.done [#allocation7], 768
    $region41: #{tpu_custom_call.1} parent=1 // pred_fallthru
      _
    %260 = vsyncpa [#allocation3], 1
    %261 = vsyncpa [#allocation4], 1
    %262 = vsyncpa [#allocation7], 1

</llo_original>
